<compile_context>
chip_gen: v6e
topology: v6e:2x2x1
jax: 0.10.0
libtpu: 0.0.40
codegen_flags: <defaults>
</compile_context>

<pallas_src>
import functools

import jax
import jax.numpy as jnp
from jax import lax
from jax.experimental import pallas as pl
from jax.experimental.pallas import tpu as pltpu


def _make_kernel(chunk: int, n_chunks: int):
    """Build the kernel for one batch tile, sub-chunked along the lane axis."""

    def _compute(xc, w1, b1, w2, b2):
        # fc1 + ReLU : [96, 13] @ [13, C] -> [96, C]
        h = jnp.dot(w1, xc, preferred_element_type=jnp.float32)
        h = jnp.maximum(h + b1, 0.0)
        # fc2 : [3, 96] @ [96, C] -> [3, C]
        logits = jnp.dot(w2, h, preferred_element_type=jnp.float32) + b2
        # Numerically stable log_softmax over the 3 class rows, written as an
        # explicit 3-way elementwise max / sum-of-exp (VPU/EUP; no lane-axis
        # XLU reduction).
        r0 = logits[0:1, :]
        r1 = logits[1:2, :]
        r2 = logits[2:3, :]
        m = jnp.maximum(jnp.maximum(r0, r1), r2)
        lse = m + jnp.log(jnp.exp(r0 - m) + jnp.exp(r1 - m) + jnp.exp(r2 - m))
        return logits - lse

    def kernel(x_ref, w1_ref, b1_ref, w2_ref, b2_ref, o_ref):
        # Hoist the resident weight/bias loads out of the chunk loop.
        w1 = w1_ref[...]                      # [96, 13]
        b1 = b1_ref[...]                      # [96, 1]
        w2 = w2_ref[...]                      # [3, 96]
        b2 = b2_ref[...]                      # [3, 1]

        if n_chunks == 1:
            o_ref[...] = _compute(x_ref[...], w1, b1, w2, b2)
        else:
            def body(j, carry):
                j0 = pl.multiple_of(j * chunk, chunk)
                xc = x_ref[:, pl.ds(j0, chunk)]            # [13, chunk]
                o_ref[:, pl.ds(j0, chunk)] = _compute(xc, w1, b1, w2, b2)
                return carry

            lax.fori_loop(0, n_chunks, body, 0)

    return kernel


def net_forward_t(xT, w1, b1, w2, b2, *, tb=32768, chunk=256):
    """Feature-major fast path: xT [13, B] f32 -> log-probs [3, B] f32.

    Params in PyTorch layout: w1 [96, 13], b1 [96], w2 [3, 96], b2 [3].
    No wrapper-side transposes; xT tiles stream through a batch-tiled grid
    with resident weights.
    """
    in_f, B = xT.shape
    hid = w1.shape[0]
    out_f = w2.shape[0]

    b1c = b1.reshape(hid, 1)
    b2c = b2.reshape(out_f, 1)

    # --- Tile selection -----------------------------------------------------
    if B <= 1024:
        # Genuinely small batch: single grid step, block == full array dim.
        TB, n_steps = B, 1
    else:
        # Balanced tiles, multiple of 128, capped by tb, and always >= 2 grid
        # steps so the ("parallel",) axis can shard across v7x's 2 TensorCores.
        n_steps = max(2, pl.cdiv(B, tb))
        TB = pl.cdiv(pl.cdiv(B, n_steps), 128) * 128
        n_steps = pl.cdiv(B, TB)
    B_pad = TB * n_steps
    if B_pad != B:
        # Ragged batch: pad the lane axis (zeros flow through exp/log to finite
        # values and are sliced off below).
        xT = jnp.pad(xT, ((0, 0), (0, B_pad - B)))

    # In-kernel lane sub-chunk so h=[96, chunk] stays in vregs (24 vregs @ 256).
    if TB % chunk == 0:
        C = chunk
    elif TB % 128 == 0:
        C = 128
    else:
        C = TB                      # tiny single-step path: one shot
    n_chunks = TB // C

    cost = pl.CostEstimate(
        flops=2 * B_pad * (in_f * hid + hid * out_f),
        transcendentals=4 * B_pad,
        bytes_accessed=4 * (in_f * B_pad + out_f * B_pad
                            + hid * in_f + hid + out_f * hid + out_f),
    )

    outT = pl.pallas_call(
        _make_kernel(C, n_chunks),
        out_shape=jax.ShapeDtypeStruct((out_f, B_pad), jnp.float32),
        grid=(n_steps,),
        in_specs=[
            pl.BlockSpec((in_f, TB), lambda i: (0, i)),        # x tile (streamed)
            pl.BlockSpec((hid, in_f), lambda i: (0, 0)),       # w1 (resident)
            pl.BlockSpec((hid, 1), lambda i: (0, 0)),          # b1 (resident)
            pl.BlockSpec((out_f, hid), lambda i: (0, 0)),      # w2 (resident)
            pl.BlockSpec((out_f, 1), lambda i: (0, 0)),        # b2 (resident)
        ],
        out_specs=pl.BlockSpec((out_f, TB), lambda i: (0, i)), # lane-dense out
        compiler_params=pltpu.CompilerParams(
            dimension_semantics=("parallel",)),                # megacore on v7x
        cost_estimate=cost,
    )(xT, w1, b1c, w2, b2c)

    return outT if B_pad == B else outT[:, :B]


def net_forward(x, w1, b1, w2, b2, **kw):
    """PyTorch-interface parity: x [B, 13] -> log-probs [B, 3].

    NOTE: the two transposes here are extra XLA HBM passes kept only for
    drop-in compatibility; large-B producers should emit feature-major xT and
    call `net_forward_t` directly (no layout plumbing at all).
    """
    return net_forward_t(x.T, w1, b1, w2, b2, **kw).T


def init_params(key):
    # Deterministic synthetic init, PyTorch-native shapes ([out, in] weights).
    k1, k2, k3, k4 = jax.random.split(key, 4)
    w1 = jax.random.uniform(k1, (96, 13), jnp.float32, -0.1, 0.1)
    b1 = jax.random.uniform(k2, (96,), jnp.float32, -0.1, 0.1)
    w2 = jax.random.uniform(k3, (3, 96), jnp.float32, -0.1, 0.1)
    b2 = jax.random.uniform(k4, (3,), jnp.float32, -0.1, 0.1)
    return w1, b1, w2, b2


def reference_forward(x, w1, b1, w2, b2):
    h = jnp.maximum(x @ w1.T + b1, 0.0)
    logits = h @ w2.T + b2
    return jax.nn.log_softmax(logits, axis=-1)


if __name__ == "__main__":
    key = jax.random.PRNGKey(0)
    kx1, kx2, kp = jax.random.split(key, 3)
    w1, b1, w2, b2 = init_params(kp)

    # 1) Module-parity interface, tiny batch: single grid step, single chunk.
    batch = 8
    x = jax.random.normal(kx1, (batch, 13), jnp.float32)
    out = jax.block_until_ready(net_forward(x, w1, b1, w2, b2))
    ref = reference_forward(x, w1, b1, w2, b2)
    assert out.shape == (batch, 3)
    assert jnp.allclose(out, ref, atol=1e-5, rtol=1e-5)

    # 2) Feature-major fast path (no wrapper transposes): ragged B exercises
    #    the >=2-step tiled grid, lane padding, and the in-kernel chunk loop.
    batch2 = 2600
    xT2 = jax.random.normal(kx2, (13, batch2), jnp.float32)
    outT2 = jax.block_until_ready(net_forward_t(xT2, w1, b1, w2, b2))
    ref2 = reference_forward(xT2.T, w1, b1, w2, b2).T
    assert outT2.shape == (3, batch2)
    assert jnp.allclose(outT2, ref2, atol=1e-5, rtol=1e-5)

    print("KERNEL_OK")
</pallas_src>

<mosaic_0001>
module attributes {stable_mosaic.version = 11 : i64} {
  func.func @kernel(%arg0: i32, %arg1: memref<13x8xf32, #tpu.memory_space<vmem>>, %arg2: memref<96x13xf32, #tpu.memory_space<vmem>>, %arg3: memref<96x1xf32, #tpu.memory_space<vmem>>, %arg4: memref<3x96xf32, #tpu.memory_space<vmem>>, %arg5: memref<3x1xf32, #tpu.memory_space<vmem>>, %arg6: memref<3x8xf32, #tpu.memory_space<vmem>>) attributes {dimension_semantics = [#tpu.dimension_semantics<parallel>], iteration_bounds = array<i64: 1>, scalar_prefetch = 0 : i64, scratch_operands = 0 : i64, tpu.core_type = #tpu.core_type<tc>, window_params = [{transform_indices = @transform_0, window_bounds = array<i64: 13, 8>}, {pipeline_mode = #tpu.pipeline_mode<synchronous>, transform_indices = @transform_1, window_bounds = array<i64: 96, 13>}, {pipeline_mode = #tpu.pipeline_mode<synchronous>, transform_indices = @transform_2, window_bounds = array<i64: 96, 1>}, {pipeline_mode = #tpu.pipeline_mode<synchronous>, transform_indices = @transform_3, window_bounds = array<i64: 3, 96>}, {pipeline_mode = #tpu.pipeline_mode<synchronous>, transform_indices = @transform_4, window_bounds = array<i64: 3, 1>}, {transform_indices = @transform_5, window_bounds = array<i64: 3, 8>}]} {
    %c0 = arith.constant 0 : index
    %c0_0 = arith.constant 0 : index
    %0 = vector.load %arg2[%c0, %c0_0] : memref<96x13xf32, #tpu.memory_space<vmem>>, vector<96x13xf32>
    %c0_1 = arith.constant 0 : index
    %c0_2 = arith.constant 0 : index
    %1 = vector.load %arg3[%c0_1, %c0_2] : memref<96x1xf32, #tpu.memory_space<vmem>>, vector<96x1xf32>
    %c0_3 = arith.constant 0 : index
    %c0_4 = arith.constant 0 : index
    %2 = vector.load %arg4[%c0_3, %c0_4] : memref<3x96xf32, #tpu.memory_space<vmem>>, vector<3x96xf32>
    %c0_5 = arith.constant 0 : index
    %c0_6 = arith.constant 0 : index
    %3 = vector.load %arg5[%c0_5, %c0_6] : memref<3x1xf32, #tpu.memory_space<vmem>>, vector<3x1xf32>
    %c0_7 = arith.constant 0 : index
    %c0_8 = arith.constant 0 : index
    %4 = vector.load %arg1[%c0_7, %c0_8] : memref<13x8xf32, #tpu.memory_space<vmem>>, vector<13x8xf32>
    %cst = arith.constant dense<0.000000e+00> : vector<96x8xf32>
    %5 = tpu.matmul %0, %4, %cst {dimension_numbers = #tpu.dot_dimension_numbers<[1], [0], [0], [1], [0, 0, 1, 1], [], []>} : vector<96x13xf32>, vector<13x8xf32>, vector<96x8xf32> -> vector<96x8xf32>
    %6 = vector.broadcast %1 : vector<96x1xf32> to vector<96x8xf32>
    %7 = arith.addf %5, %6 : vector<96x8xf32>
    %cst_9 = arith.constant 0.000000e+00 : f32
    %8 = vector.broadcast %cst_9 : f32 to vector<96x8xf32>
    %9 = arith.maximumf %7, %8 : vector<96x8xf32>
    %cst_10 = arith.constant dense<0.000000e+00> : vector<3x8xf32>
    %10 = tpu.matmul %2, %9, %cst_10 {dimension_numbers = #tpu.dot_dimension_numbers<[1], [0], [0], [1], [0, 0, 1, 1], [], []>} : vector<3x96xf32>, vector<96x8xf32>, vector<3x8xf32> -> vector<3x8xf32>
    %11 = vector.broadcast %3 : vector<3x1xf32> to vector<3x8xf32>
    %12 = arith.addf %10, %11 : vector<3x8xf32>
    %13 = vector.extract_strided_slice %12 {offsets = [0, 0], sizes = [1, 8], strides = [1, 1]} : vector<3x8xf32> to vector<1x8xf32>
    %14 = vector.extract_strided_slice %12 {offsets = [1, 0], sizes = [1, 8], strides = [1, 1]} : vector<3x8xf32> to vector<1x8xf32>
    %15 = vector.extract_strided_slice %12 {offsets = [2, 0], sizes = [1, 8], strides = [1, 1]} : vector<3x8xf32> to vector<1x8xf32>
    %16 = arith.maximumf %13, %14 : vector<1x8xf32>
    %17 = arith.maximumf %16, %15 : vector<1x8xf32>
    %18 = arith.subf %13, %17 : vector<1x8xf32>
    %19 = math.exp %18 : vector<1x8xf32>
    %20 = arith.subf %14, %17 : vector<1x8xf32>
    %21 = math.exp %20 : vector<1x8xf32>
    %22 = arith.addf %19, %21 : vector<1x8xf32>
    %23 = arith.subf %15, %17 : vector<1x8xf32>
    %24 = math.exp %23 : vector<1x8xf32>
    %25 = arith.addf %22, %24 : vector<1x8xf32>
    %26 = math.log %25 : vector<1x8xf32>
    %27 = arith.addf %17, %26 : vector<1x8xf32>
    %28 = vector.broadcast %27 : vector<1x8xf32> to vector<3x8xf32>
    %29 = arith.subf %12, %28 : vector<3x8xf32>
    %c0_11 = arith.constant 0 : index
    %c0_12 = arith.constant 0 : index
    %30 = vector.load %arg6[%c0_11, %c0_12] : memref<3x8xf32, #tpu.memory_space<vmem>>, vector<3x8xf32>
    tpu.vector_store %arg6[%c0_11, %c0_12], %29 {strides = array<i32>} : memref<3x8xf32, #tpu.memory_space<vmem>>, vector<3x8xf32>,
    return
  }
  func.func @transform_0(%arg0: i32) -> (i32, i32) {
    %c0_i32 = arith.constant 0 : i32
    %c0_i32_0 = arith.constant 0 : i32
    return %c0_i32, %arg0 : i32, i32
  }
  func.func @transform_1(%arg0: i32) -> (i32, i32) {
    %c0_i32 = arith.constant 0 : i32
    %c0_i32_0 = arith.constant 0 : i32
    %c0_i32_1 = arith.constant 0 : i32
    return %c0_i32, %c0_i32_0 : i32, i32
  }
  func.func @transform_2(%arg0: i32) -> (i32, i32) {
    %c0_i32 = arith.constant 0 : i32
    %c0_i32_0 = arith.constant 0 : i32
    %c0_i32_1 = arith.constant 0 : i32
    return %c0_i32, %c0_i32_0 : i32, i32
  }
  func.func @transform_3(%arg0: i32) -> (i32, i32) {
    %c0_i32 = arith.constant 0 : i32
    %c0_i32_0 = arith.constant 0 : i32
    %c0_i32_1 = arith.constant 0 : i32
    return %c0_i32, %c0_i32_0 : i32, i32
  }
  func.func @transform_4(%arg0: i32) -> (i32, i32) {
    %c0_i32 = arith.constant 0 : i32
    %c0_i32_0 = arith.constant 0 : i32
    %c0_i32_1 = arith.constant 0 : i32
    return %c0_i32, %c0_i32_0 : i32, i32
  }
  func.func @transform_5(%arg0: i32) -> (i32, i32) {
    %c0_i32 = arith.constant 0 : i32
    %c0_i32_0 = arith.constant 0 : i32
    return %c0_i32, %arg0 : i32, i32
  }
}

</mosaic_0001>

<llo_original>
// kernel: tpu_custom_call.1
$region0: #{tpu_custom_call.1}
  #allocation0 [shape = 'u32[]', space=smem, size = 0x4, offset = 0x4, fixed_abs, tag = 'smem constant byte address 0x4 - core index']
  #allocation1 [shape = 'u32[144,128]{1,0:T(1,128)}', space=vmem, size = 0x12000, scoped, tag = 'internal scratch']
  %s0 = inlined_call_operand.vmem [shape: f32[13,8], index: 0, kind: input, shape index: {}]
  %s1 = inlined_call_operand.vmem [shape: f32[96,13], index: 1, kind: input, shape index: {}]
  %s2 = inlined_call_operand.vmem [shape: f32[96,1], index: 2, kind: input, shape index: {}]
  %s3 = inlined_call_operand.vmem [shape: f32[3,96], index: 3, kind: input, shape index: {}]
  %s4 = inlined_call_operand.vmem [shape: f32[3,1], index: 4, kind: input, shape index: {}]
  %s5 = inlined_call_operand.hbm [shape: f32[3,8], index: 5, kind: output, shape index: {}]
  %s6 = sld [smem:[#allocation0]]
  $region30: #{tpu_custom_call.1} parent=0
    _
  %s8 = ssub.s32 1, %s6
  %s9 = scalar_select 0, %s8, %s6
  $region1: #{tpu_custom_call.1} parent=0
    #allocation2 [shape = 'u8[2048]{0}', space=vmem, size = 0x800, scoped, tag = 'output window, operand 0, single buffered']
    #allocation3 [shape = 's32[1]{0}', space=sflag, size = 0x4, scoped, tag = 'scoped memory for tpu_custom_call.1']
    %10 = vsyncpa [#allocation3], 0
    // Predicated region
    $region2: #{tpu_custom_call.1} parent=1 // pred_check
      _
    $region3: #{tpu_custom_call.1} parent=1 // pred_check_branch
      %12 = sbr.rel (0) target = $region5
    $region4: #{tpu_custom_call.1} parent=1 // pred_region
      _
    $region5: #{tpu_custom_call.1} parent=1 // pred_fallthru
      _
    // Predicated region
    $region6: #{tpu_custom_call.1} parent=1 // pred_check
      _
    $region7: #{tpu_custom_call.1} parent=1 // pred_check_branch
      %14 = sbr.rel (0) target = $region9
    $region8: #{tpu_custom_call.1} parent=1 // pred_region
      _
    $region9: #{tpu_custom_call.1} parent=1 // pred_fallthru
      _
    // Predicated region
    $region10: #{tpu_custom_call.1} parent=1 // pred_check
      _
    $region11: #{tpu_custom_call.1} parent=1 // pred_check_branch
      %16 = sbr.rel (0) target = $region13
    $region12: #{tpu_custom_call.1} parent=1 // pred_region
      _
    $region13: #{tpu_custom_call.1} parent=1 // pred_fallthru
      _
    // Predicated region
    $region14: #{tpu_custom_call.1} parent=1 // pred_check
      _
    $region15: #{tpu_custom_call.1} parent=1 // pred_check_branch
      %18 = sbr.rel (0) target = $region17
    $region16: #{tpu_custom_call.1} parent=1 // pred_region
      _
    $region17: #{tpu_custom_call.1} parent=1 // pred_fallthru
      _
    // Predicated region
    $region18: #{tpu_custom_call.1} parent=1 // pred_check
      _
    $region19: #{tpu_custom_call.1} parent=1 // pred_check_branch
      %20 = sbr.rel (0) target = $region21
    $region20: #{tpu_custom_call.1} parent=1 // pred_region
      _
    $region21: #{tpu_custom_call.1} parent=1 // pred_fallthru
      _
    %v21 = vld [vmem:[%s1] sm:$0xff]
    %v22 = vld [vmem:[%s1 + $0x8] sm:$0xff]
    %v23 = vld [vmem:[%s1 + $0x10] sm:$0xff]
    %v24 = vld [vmem:[%s1 + $0x18] sm:$0xff]
    %v25 = vld [vmem:[%s1 + $0x20] sm:$0xff]
    %v26 = vld [vmem:[%s1 + $0x28] sm:$0xff]
    %v27 = vld [vmem:[%s1 + $0x30] sm:$0xff]
    %v28 = vld [vmem:[%s1 + $0x38] sm:$0xff]
    %v29 = vld [vmem:[%s1 + $0x40] sm:$0xff]
    %v30 = vld [vmem:[%s1 + $0x48] sm:$0xff]
    %v31 = vld [vmem:[%s1 + $0x50] sm:$0xff]
    %v32 = vld [vmem:[%s1 + $0x58] sm:$0xff]
    %v33 = vld [vmem:[%s2] sm:$0xff]
    %v34 = vld [vmem:[%s2 + $0x8] sm:$0xff]
    %v35 = vld [vmem:[%s2 + $0x10] sm:$0xff]
    %v36 = vld [vmem:[%s2 + $0x18] sm:$0xff]
    %v37 = vld [vmem:[%s2 + $0x20] sm:$0xff]
    %v38 = vld [vmem:[%s2 + $0x28] sm:$0xff]
    %v39 = vld [vmem:[%s2 + $0x30] sm:$0xff]
    %v40 = vld [vmem:[%s2 + $0x38] sm:$0xff]
    %v41 = vld [vmem:[%s2 + $0x40] sm:$0xff]
    %v42 = vld [vmem:[%s2 + $0x48] sm:$0xff]
    %v43 = vld [vmem:[%s2 + $0x50] sm:$0xff]
    %v44 = vld [vmem:[%s2 + $0x58] sm:$0xff]
    %v45 = vld [vmem:[%s3] sm:$0x7]
    %v46 = vld [vmem:[%s4] sm:$0x7]
    %v47 = vld [vmem:[%s0] sm:$0xff]
    %v48 = vld [vmem:[%s0 + $0x8] sm:$0x1f]
    %50 = vset.pattern.permute.xlu0 0
    %51 = vperm.xlu0 %50, %v33
    %v52 = vpop.permute.xlu0 %51
    %55 = vset.pattern.permute.xlu0 0
    %56 = vperm.xlu0 %55, %v34
    %v57 = vpop.permute.xlu0 %56
    %60 = vset.pattern.permute.xlu0 0
    %61 = vperm.xlu0 %60, %v35
    %v62 = vpop.permute.xlu0 %61
    %65 = vset.pattern.permute.xlu0 0
    %66 = vperm.xlu0 %65, %v36
    %v67 = vpop.permute.xlu0 %66
    %70 = vset.pattern.permute.xlu0 0
    %71 = vperm.xlu0 %70, %v37
    %v72 = vpop.permute.xlu0 %71
    %75 = vset.pattern.permute.xlu0 0
    %76 = vperm.xlu0 %75, %v38
    %v77 = vpop.permute.xlu0 %76
    %80 = vset.pattern.permute.xlu0 0
    %81 = vperm.xlu0 %80, %v39
    %v82 = vpop.permute.xlu0 %81
    %85 = vset.pattern.permute.xlu0 0
    %86 = vperm.xlu0 %85, %v40
    %v87 = vpop.permute.xlu0 %86
    %90 = vset.pattern.permute.xlu0 0
    %91 = vperm.xlu0 %90, %v41
    %v92 = vpop.permute.xlu0 %91
    %95 = vset.pattern.permute.xlu0 0
    %96 = vperm.xlu0 %95, %v42
    %v97 = vpop.permute.xlu0 %96
    %100 = vset.pattern.permute.xlu0 0
    %101 = vperm.xlu0 %100, %v43
    %v102 = vpop.permute.xlu0 %101
    %105 = vset.pattern.permute.xlu0 0
    %106 = vperm.xlu0 %105, %v44
    %v107 = vpop.permute.xlu0 %106
    %vm109 = vcmask 105472
    %v111 = vsel %vm109, %v21, 0
    %v114 = vsel %vm109, %v22, 0
    %v117 = vsel %vm109, %v23, 0
    %v120 = vsel %vm109, %v24, 0
    %v123 = vsel %vm109, %v25, 0
    %v126 = vsel %vm109, %v26, 0
    %v129 = vsel %vm109, %v27, 0
    %v132 = vsel %vm109, %v28, 0
    %v135 = vsel %vm109, %v29, 0
    %v138 = vsel %vm109, %v30, 0
    %v141 = vsel %vm109, %v31, 0
    %v144 = vsel %vm109, %v32, 0
    %vm146 = vcmask 1044480
    %v148 = vsel %vm146, %v48, 0
    %150 = vmatprep.subr.mxu0 0.0
    %151 = vmatpush1.msra.mxu0 0.0
    %152 = vmatprep.subr.mxu0 0.0
    %153 = vmatpush1.msra.mxu0 0.0
    %154 = vmatprep.subr.mxu0 0.0
    %155 = vmatpush1.msra.mxu0 0.0
    %156 = vmatprep.subr.mxu0 0.0
    %157 = vmatpush1.msra.mxu0 0.0
    %158 = vmatprep.subr.mxu0 0.0
    %159 = vmatpush1.msra.mxu0 0.0
    %160 = vmatprep.subr.mxu0 0.0
    %161 = vmatpush1.msra.mxu0 0.0
    %162 = vmatprep.subr.mxu0 0.0
    %163 = vmatpush1.msra.mxu0 0.0
    %164 = vmatprep.subr.mxu0 0.0
    %165 = vmatpush1.msra.mxu0 0.0
    %166 = vmatprep.subr.mxu0 0.0
    %167 = vmatpush1.msra.mxu0 0.0
    %168 = vmatprep.subr.mxu0 0.0
    %169 = vmatpush1.msra.mxu0 0.0
    %170 = vmatprep.subr.mxu0 0.0
    %171 = vmatpush1.msra.mxu0 0.0
    %172 = vmatprep.subr.mxu0 0.0
    %173 = vmatpush1.msra.mxu0 0.0
    %174 = vmatprep.subr.mxu0 0.0
    %175 = vmatpush1.msra.mxu0 0.0
    %176 = vmatprep.subr.mxu0 0.0
    %177 = vmatpush1.msra.mxu0 0.0
    %178 = vmatprep.subr.mxu0 0.0
    %179 = vmatpush1.msra.mxu0 %v148
    %180 = vmatprep.subr.mxu0 0.0
    %181 = vmatpush1.msra.mxu0 %v47
    %182 = vmatprep.subr.mxu0 0.0
    %183 = vmatpush2.msra.mxu0 0.0
    %184 = vmatprep.subr.mxu0 0.0
    %185 = vmatpush2.msra.mxu0 0.0
    %186 = vmatprep.subr.mxu0 0.0
    %187 = vmatpush2.msra.mxu0 0.0
    %188 = vmatprep.subr.mxu0 0.0
    %189 = vmatpush2.msra.mxu0 0.0
    %190 = vmatprep.subr.mxu0 0.0
    %191 = vmatpush2.msra.mxu0 0.0
    %192 = vmatprep.subr.mxu0 0.0
    %193 = vmatpush2.msra.mxu0 0.0
    %194 = vmatprep.subr.mxu0 0.0
    %195 = vmatpush2.msra.mxu0 0.0
    %196 = vmatprep.subr.mxu0 0.0
    %197 = vmatpush2.msra.mxu0 0.0
    %198 = vmatprep.subr.mxu0 0.0
    %199 = vmatpush2.msra.mxu0 0.0
    %200 = vmatprep.subr.mxu0 0.0
    %201 = vmatpush2.msra.mxu0 0.0
    %202 = vmatprep.subr.mxu0 0.0
    %203 = vmatpush2.msra.mxu0 0.0
    %204 = vmatprep.subr.mxu0 0.0
    %205 = vmatpush2.msra.mxu0 0.0
    %206 = vmatprep.subr.mxu0 0.0
    %207 = vmatpush2.msra.mxu0 0.0
    %208 = vmatprep.subr.mxu0 0.0
    %209 = vmatpush2.msra.mxu0 0.0
    %210 = vmatprep.subr.mxu0 0.0
    %211 = vmatpush2.msra.mxu0 0.0
    %212 = vmatprep.subr.mxu0 0.0
    %213 = vmatpush2.msra.mxu0 0.0
    %214 = vmatprep.mubr.f32.mxu0 0.0
    %215 = vmatmul.mubr.f32.gmra.mxu0 %v111
    %v216 = vpop.f32.mrf.mxu0
    %v217 = vadd.f32 %v52, %v216
    %v218 = vpop.f32.mrf.mxu0
    %219 = vmatprep.mubr.f32.mxu0 0.0
    %220 = vmatmul.mubr.f32.gmra.mxu0 %v114
    %v221 = vpop.f32.mrf.mxu0
    %v222 = vadd.f32 %v57, %v221
    %v223 = vpop.f32.mrf.mxu0
    %224 = vmatprep.mubr.f32.mxu0 0.0
    %225 = vmatmul.mubr.f32.gmra.mxu0 %v117
    %v226 = vpop.f32.mrf.mxu0
    %v227 = vadd.f32 %v62, %v226
    %v228 = vpop.f32.mrf.mxu0
    %229 = vmatprep.mubr.f32.mxu0 0.0
    %230 = vmatmul.mubr.f32.gmra.mxu0 %v120
    %v231 = vpop.f32.mrf.mxu0
    %v232 = vadd.f32 %v67, %v231
    %v233 = vpop.f32.mrf.mxu0
    %234 = vmatprep.mubr.f32.mxu0 0.0
    %235 = vmatmul.mubr.f32.gmra.mxu0 %v123
    %v236 = vpop.f32.mrf.mxu0
    %v237 = vadd.f32 %v72, %v236
    %v238 = vpop.f32.mrf.mxu0
    %239 = vmatprep.mubr.f32.mxu0 0.0
    %240 = vmatmul.mubr.f32.gmra.mxu0 %v126
    %v241 = vpop.f32.mrf.mxu0
    %v242 = vadd.f32 %v77, %v241
    %v243 = vpop.f32.mrf.mxu0
    %244 = vmatprep.mubr.f32.mxu0 0.0
    %245 = vmatmul.mubr.f32.gmra.mxu0 %v129
    %v246 = vpop.f32.mrf.mxu0
    %v247 = vadd.f32 %v82, %v246
    %v248 = vpop.f32.mrf.mxu0
    %249 = vmatprep.mubr.f32.mxu0 0.0
    %250 = vmatmul.mubr.f32.gmra.mxu0 %v132
    %v251 = vpop.f32.mrf.mxu0
    %v252 = vadd.f32 %v87, %v251
    %v253 = vpop.f32.mrf.mxu0
    %254 = vmatprep.mubr.f32.mxu0 0.0
    %255 = vmatmul.mubr.f32.gmra.mxu0 %v135
    %v256 = vpop.f32.mrf.mxu0
    %v257 = vadd.f32 %v92, %v256
    %v258 = vpop.f32.mrf.mxu0
    %259 = vmatprep.mubr.f32.mxu0 0.0
    %260 = vmatmul.mubr.f32.gmra.mxu0 %v138
    %v261 = vpop.f32.mrf.mxu0
    %v262 = vadd.f32 %v97, %v261
    %v263 = vpop.f32.mrf.mxu0
    %264 = vmatprep.mubr.f32.mxu0 0.0
    %265 = vmatmul.mubr.f32.gmra.mxu0 %v141
    %v266 = vpop.f32.mrf.mxu0
    %v267 = vadd.f32 %v102, %v266
    %v268 = vpop.f32.mrf.mxu0
    %269 = vmatprep.mubr.f32.mxu0 0.0
    %270 = vmatmul.mubr.f32.gmra.mxu0 %v144
    %v271 = vpop.f32.mrf.mxu0
    %v272 = vadd.f32 %v107, %v271
    %v273 = vpop.f32.mrf.mxu0
    %274 = vdwg.mxu0
    %v275 = vmax.f32 %v217, 0.0
    %v276 = vmax.f32 %v222, 0.0
    %v277 = vmax.f32 %v227, 0.0
    %v278 = vmax.f32 %v232, 0.0
    %v279 = vmax.f32 %v237, 0.0
    %v280 = vmax.f32 %v242, 0.0
    %v281 = vmax.f32 %v247, 0.0
    %v282 = vmax.f32 %v252, 0.0
    %v283 = vmax.f32 %v257, 0.0
    %v284 = vmax.f32 %v262, 0.0
    %v285 = vmax.f32 %v267, 0.0
    %v286 = vmax.f32 %v272, 0.0
    %288 = vset.pattern.permute.xlu0 0
    %289 = vperm.xlu0 %288, %v46
    %v290 = vpop.permute.xlu0 %289
    %vm292 = vcmask 785408
    %v294 = vsel %vm292, %v45, 0
    %296 = vmatprep.subr.mxu0 0.0
    %297 = vmatpush1.msra.mxu0 0.0
    %298 = vmatprep.subr.mxu0 0.0
    %299 = vmatpush1.msra.mxu0 0.0
    %300 = vmatprep.subr.mxu0 0.0
    %301 = vmatpush1.msra.mxu0 0.0
    %302 = vmatprep.subr.mxu0 0.0
    %303 = vmatpush1.msra.mxu0 0.0
    %304 = vmatprep.subr.mxu0 0.0
    %305 = vmatpush1.msra.mxu0 %v286
    %306 = vmatprep.subr.mxu0 0.0
    %307 = vmatpush1.msra.mxu0 %v285
    %308 = vmatprep.subr.mxu0 0.0
    %309 = vmatpush1.msra.mxu0 %v284
    %310 = vmatprep.subr.mxu0 0.0
    %311 = vmatpush1.msra.mxu0 %v283
    %312 = vmatprep.subr.mxu0 0.0
    %313 = vmatpush1.msra.mxu0 %v282
    %314 = vmatprep.subr.mxu0 0.0
    %315 = vmatpush1.msra.mxu0 %v281
    %316 = vmatprep.subr.mxu0 0.0
    %317 = vmatpush1.msra.mxu0 %v280
    %318 = vmatprep.subr.mxu0 0.0
    %319 = vmatpush1.msra.mxu0 %v279
    %320 = vmatprep.subr.mxu0 0.0
    %321 = vmatpush1.msra.mxu0 %v278
    %322 = vmatprep.subr.mxu0 0.0
    %323 = vmatpush1.msra.mxu0 %v277
    %324 = vmatprep.subr.mxu0 0.0
    %325 = vmatpush1.msra.mxu0 %v276
    %326 = vmatprep.subr.mxu0 0.0
    %327 = vmatpush1.msra.mxu0 %v275
    %328 = vmatprep.subr.mxu0 0.0
    %329 = vmatpush2.msra.mxu0 0.0
    %330 = vmatprep.subr.mxu0 0.0
    %331 = vmatpush2.msra.mxu0 0.0
    %332 = vmatprep.subr.mxu0 0.0
    %333 = vmatpush2.msra.mxu0 0.0
    %334 = vmatprep.subr.mxu0 0.0
    %335 = vmatpush2.msra.mxu0 0.0
    %336 = vmatprep.subr.mxu0 0.0
    %337 = vmatpush2.msra.mxu0 0.0
    %338 = vmatprep.subr.mxu0 0.0
    %339 = vmatpush2.msra.mxu0 0.0
    %340 = vmatprep.subr.mxu0 0.0
    %341 = vmatpush2.msra.mxu0 0.0
    %342 = vmatprep.subr.mxu0 0.0
    %343 = vmatpush2.msra.mxu0 0.0
    %344 = vmatprep.subr.mxu0 0.0
    %345 = vmatpush2.msra.mxu0 0.0
    %346 = vmatprep.subr.mxu0 0.0
    %347 = vmatpush2.msra.mxu0 0.0
    %348 = vmatprep.subr.mxu0 0.0
    %349 = vmatpush2.msra.mxu0 0.0
    %350 = vmatprep.subr.mxu0 0.0
    %351 = vmatpush2.msra.mxu0 0.0
    %352 = vmatprep.subr.mxu0 0.0
    %353 = vmatpush2.msra.mxu0 0.0
    %354 = vmatprep.subr.mxu0 0.0
    %355 = vmatpush2.msra.mxu0 0.0
    %356 = vmatprep.subr.mxu0 0.0
    %357 = vmatpush2.msra.mxu0 0.0
    %358 = vmatprep.subr.mxu0 0.0
    %359 = vmatpush2.msra.mxu0 0.0
    %360 = vmatprep.mubr.f32.mxu0 0.0
    %361 = vmatmul.mubr.f32.gmra.mxu0 %v294
    %v362 = vpop.f32.mrf.mxu0
    %v363 = vadd.f32 %v290, %v362
    %v364 = vpop.f32.mrf.mxu0
    %365 = vdwg.mxu0
    %v367 = vrot.slane %v363, 1
    %v369 = vmax.f32 %v363, %v367
    %v370 = vrot.slane %v363, 2
    %v372 = vmax.f32 %v369, %v370
    %v373 = vsub.f32 %v363, %v372
    %v374 = vmul.f32 %v373, 1.442695
    %v375 = vpow.pop %v374
    %v377 = vrot.slane %v372, 7
    %v379 = vsub.f32 %v363, %v377
    %v380 = vmul.f32 %v379, 1.442695
    %v381 = vpow.pop %v380
    %v383 = vrot.slane %v381, 1
    %v385 = vadd.f32 %v375, %v383
    %v386 = vrot.slane %v372, 6
    %v388 = vsub.f32 %v363, %v386
    %v389 = vmul.f32 %v388, 1.442695
    %v390 = vpow.pop %v389
    %v392 = vrot.slane %v390, 2
    %v394 = vadd.f32 %v385, %v392
    %v395 = vlog2.pop %v394
    %v396 = vmul.f32 %v395, 0.6931472
    %v397 = vadd.f32 %v372, %v396
    %v398 = vlaneseq
    %v399 = vshrl.u32 %v398, 7
    %v400 = vsub.s32 0, %v399
    %v401 = vrot.slane %v397, %v400
    %v402 = vsub.f32 %v363, %v401
    %vm403 = vcmask 59392
    %404 = vst.msk [vmem:[#allocation2] sm:$0x7] %vm403, %v402
    // Predicated region
    $region22: #{tpu_custom_call.1} parent=1 // pred_check
      _
    $region23: #{tpu_custom_call.1} parent=1 // pred_check_branch
      %406 = sbr.rel (0) target = $region25
    $region24: #{tpu_custom_call.1} parent=1 // pred_region
      %s408 = ssub.s32 64, 64
      %409 = vsyncadd [#allocation3], %s408
      %s411 = sshll.u32 [#allocation2], 4
      %s412 = int_to_ptr.vmem [resolvable:$true] %s411
      %414 = dma.vmem_to_hbm [thread:$0]  %s412, 64, %s5, [#allocation3]
    $region25: #{tpu_custom_call.1} parent=1 // pred_fallthru
      _
    // Predicated region
    $region26: #{tpu_custom_call.1} parent=1 // pred_check
      _
    $region27: #{tpu_custom_call.1} parent=1 // pred_check_branch
      %416 = sbr.rel (0) target = $region29
    $region28: #{tpu_custom_call.1} parent=1 // pred_region
      %417 = dma.done [#allocation3], 64
    $region29: #{tpu_custom_call.1} parent=1 // pred_fallthru
      _
    %418 = vsyncpa [#allocation3], 1

</llo_original>
